<compile_context>
chip_gen: v6e
topology: v6e:2x2x1
jax: 0.10.0
libtpu: 0.0.40
codegen_flags: <defaults>
</compile_context>

<pallas_src>
import functools
import math

import jax
import jax.numpy as jnp
from jax.experimental import pallas as pl
from jax.experimental.pallas import tpu as pltpu


# --------------------------------------------------------------------------- #
# In-kernel sinusoidal PE generation (matches the torch buffer exactly):
#   pe[p, 2i]   = sin(p * exp(-2i * ln(10000)/d_model))
#   pe[p, 2i+1] = cos(p * exp(-2i * ln(10000)/d_model))
# cos(x) is evaluated as sin(x + pi/2) so only one transcendental pass over the
# tile is needed; exp is evaluated on a single lane-row and broadcast.
# --------------------------------------------------------------------------- #
def _sinusoid(shape, *, pos_axis, feat_axis, pos_start, d_model):
    feat_shape = tuple(s if a == feat_axis else 1 for a, s in enumerate(shape))
    d_idx = jax.lax.broadcasted_iota(jnp.int32, feat_shape, feat_axis)
    two_i = (d_idx - (d_idx & 1)).astype(jnp.float32)              # 2 * (d // 2)
    inv_freq = jnp.exp(two_i * (-math.log(10000.0) / d_model))     # (1, ..., d_model)
    phase = (d_idx & 1).astype(jnp.float32) * (0.5 * math.pi)      # 0 even, pi/2 odd
    pos = (jax.lax.broadcasted_iota(jnp.int32, shape, pos_axis) + pos_start
           ).astype(jnp.float32)
    return jnp.sin(pos * inv_freq + phase)


def _pe_add_kernel_3d(x_ref, o_ref, *, block_seq, d_model):
    # x_ref / o_ref: (block_seq, block_batch, d_model)
    pos_start = pl.program_id(0) * block_seq
    pe = _sinusoid((block_seq, 1, d_model), pos_axis=0, feat_axis=2,
                   pos_start=pos_start, d_model=d_model)           # (ts, 1, d)
    o_ref[...] = (x_ref[...].astype(jnp.float32) + pe).astype(o_ref.dtype)


def _pe_add_kernel_2d(x_ref, o_ref, *, block_rows, d_model):
    # x_ref / o_ref: (block_rows, d_model)   (batch == 1, lane-dense view)
    pos_start = pl.program_id(0) * block_rows
    pe = _sinusoid((block_rows, d_model), pos_axis=0, feat_axis=1,
                   pos_start=pos_start, d_model=d_model)           # (tr, d)
    o_ref[...] = (x_ref[...].astype(jnp.float32) + pe).astype(o_ref.dtype)


# --------------------------------------------------------------------------- #
# Host-side helpers
# --------------------------------------------------------------------------- #
def make_positional_encoding(d_model: int, max_len: int = 5000,
                             dtype=jnp.float32) -> jnp.ndarray:
    """Sinusoidal pe buffer [max_len, 1, d_model]. Only used as a reference here:
    the kernel regenerates pe on the fly, so nothing is cast/padded per call."""
    assert d_model % 2 == 0, "d_model must be even (same constraint as the PyTorch module)"
    position = jnp.arange(max_len, dtype=jnp.float32)[:, None]
    div_term = jnp.exp(jnp.arange(0, d_model, 2, dtype=jnp.float32)
                       * (-math.log(10000.0) / d_model))
    angles = position * div_term
    pe = jnp.zeros((max_len, d_model), dtype=jnp.float32)
    pe = pe.at[:, 0::2].set(jnp.sin(angles))
    pe = pe.at[:, 1::2].set(jnp.cos(angles))
    return pe[:, None, :].astype(dtype)


def _round_up(x: int, m: int) -> int:
    return -(-x // m) * m


def _sublane(itemsize: int) -> int:
    return max(8, 32 // max(1, itemsize))          # 8 (f32), 16 (bf16), 32 (int8)


def _vmem_capacity_bytes() -> int:
    try:
        return int(pltpu.get_tpu_info().vmem_capacity_bytes)
    except Exception:
        return 64 * 1024 * 1024                    # conservative (v7x-sized) fallback


def _generation_budget():
    """(target_tile_bytes, vmem_limit_bytes, min_seq_blocks) per TPU generation."""
    cap = _vmem_capacity_bytes()
    if cap >= 100 * 1024 * 1024:                   # v5e / v6e: 128 MiB physical VMEM
        return 16 * 1024 * 1024, 96 * 1024 * 1024, 2
    # v7x: 64 MiB physical VMEM, 2 TensorCores -> smaller tiles, >=4 blocks
    return 8 * 1024 * 1024, 48 * 1024 * 1024, 4


def _pick_blocks_3d(seq_len, batch, d_model, itemsize, *, target_bytes, min_blocks):
    """Pick (block_seq, block_batch) using VMEM-padded byte counts."""
    sub = _sublane(itemsize)
    row_bytes = _round_up(d_model, 128) * itemsize           # one padded sublane-row
    if _round_up(batch, sub) * row_bytes <= target_bytes:
        tb = batch                                           # full batch (full-extent dim)
    else:                                                    # a single position is too big
        tb = max(sub, ((target_bytes // row_bytes) // sub) * sub)
        tb = min(tb, batch)
    pos_bytes = _round_up(tb, sub) * row_bytes               # padded (1, tb, d) slab
    ts = max(1, target_bytes // pos_bytes)
    if seq_len >= min_blocks:                                # keep both v7x cores busy
        ts = min(ts, -(-seq_len // min_blocks))
    return int(min(ts, seq_len)), int(tb)


def _pick_rows_2d(n_rows, d_model, itemsize, *, target_bytes, min_blocks):
    """Pick block_rows for the lane-dense 2-D (rows, d_model) layout."""
    sub = _sublane(itemsize)
    row_bytes = _round_up(d_model, 128) * itemsize
    tr = max(1, target_bytes // row_bytes)
    if n_rows >= min_blocks * sub:
        tr = min(tr, -(-n_rows // min_blocks))
    if tr >= n_rows:
        return int(n_rows)                                   # full extent (always legal)
    if tr >= sub:
        return int((tr // sub) * sub)                        # multiple of the sublane count
    return int(min(sub, n_rows))


# --------------------------------------------------------------------------- #
# Forward
# --------------------------------------------------------------------------- #
def positional_encoding_forward(x: jnp.ndarray, *, max_len: int = 5000,
                                block_seq: int | None = None,
                                block_batch: int | None = None,
                                input_output_alias: bool = False) -> jnp.ndarray:
    """x: [seq_len, batch, d_model]; returns x + pe[:seq_len] (pe generated in-kernel).

    input_output_alias=True makes the op write into x's buffer; only enable it if x
    is donated at the jit boundary (otherwise XLA inserts a full defensive copy of x).
    """
    seq_len, batch, d_model = x.shape
    assert d_model % 2 == 0, "d_model must be even"
    assert seq_len <= max_len, "seq_len exceeds max_len (same limit as the PyTorch buffer)"

    itemsize = jnp.dtype(x.dtype).itemsize
    target_tile, vmem_limit, min_blocks = _generation_budget()
    aliases = {0: 0} if input_output_alias else {}
    cparams = pltpu.CompilerParams(vmem_limit_bytes=vmem_limit,
                                   dimension_semantics=("parallel", "parallel"))

    # ---- batch == 1 (decode): lane-dense 2-D view, full sublane utilization ---- #
    if batch == 1:
        tr = block_seq if block_seq is not None else _pick_rows_2d(
            seq_len, d_model, itemsize, target_bytes=target_tile, min_blocks=min_blocks)
        tr = int(min(tr, seq_len))
        x2 = x.reshape(seq_len, d_model)                    # free view of contiguous x
        out2 = pl.pallas_call(
            functools.partial(_pe_add_kernel_2d, block_rows=tr, d_model=d_model),
            out_shape=jax.ShapeDtypeStruct((seq_len, d_model), x.dtype),
            grid=(pl.cdiv(seq_len, tr),),
            in_specs=[pl.BlockSpec((tr, d_model), lambda r: (r, 0))],
            out_specs=pl.BlockSpec((tr, d_model), lambda r: (r, 0)),
            input_output_aliases=aliases,
            compiler_params=pltpu.CompilerParams(vmem_limit_bytes=vmem_limit,
                                                 dimension_semantics=("parallel",)),
        )(x2)
        return out2.reshape(seq_len, 1, d_model)

    # ---- general case: block over seq, and over batch if one position is huge ---- #
    ts_auto, tb_auto = _pick_blocks_3d(seq_len, batch, d_model, itemsize,
                                       target_bytes=target_tile, min_blocks=min_blocks)
    ts = int(min(block_seq if block_seq is not None else ts_auto, seq_len))
    tb = int(min(block_batch if block_batch is not None else tb_auto, batch))

    return pl.pallas_call(
        functools.partial(_pe_add_kernel_3d, block_seq=ts, d_model=d_model),
        out_shape=jax.ShapeDtypeStruct((seq_len, batch, d_model), x.dtype),
        grid=(pl.cdiv(seq_len, ts), pl.cdiv(batch, tb)),
        in_specs=[pl.BlockSpec((ts, tb, d_model), lambda s, b: (s, b, 0))],
        out_specs=pl.BlockSpec((ts, tb, d_model), lambda s, b: (s, b, 0)),
        input_output_aliases=aliases,
        compiler_params=cparams,
    )(x)


# --------------------------------------------------------------------------- #
# Self-test
# --------------------------------------------------------------------------- #
if __name__ == "__main__":
    key = jax.random.PRNGKey(0)
    k1, k2, k3, k4 = jax.random.split(key, 4)

    # 1) default 3-D path (small batch, full-extent trailing dims)
    x1 = jax.random.normal(k1, (8, 2, 32), dtype=jnp.float32)
    pe1 = make_positional_encoding(32, 64)
    out1 = jax.block_until_ready(positional_encoding_forward(x1))
    ref1 = x1 + pe1[:8]
    assert out1.shape == x1.shape
    assert jnp.allclose(out1, ref1, atol=1e-4, rtol=1e-4)

    # 2) batch == 1 (decode): lane-dense 2-D path, ragged last block
    x2 = jax.random.normal(k2, (20, 1, 128), dtype=jnp.float32)
    pe2 = make_positional_encoding(128, 64)
    out2 = jax.block_until_ready(positional_encoding_forward(x2))
    ref2 = x2 + pe2[:20]
    assert out2.shape == x2.shape
    assert jnp.allclose(out2, ref2, atol=1e-4, rtol=1e-4)

    # 3) forced 2-axis grid (seq blocked AND batch blocked)
    x3 = jax.random.normal(k3, (8, 16, 128), dtype=jnp.float32)
    pe3 = make_positional_encoding(128, 64)
    out3 = jax.block_until_ready(
        positional_encoding_forward(x3, block_seq=4, block_batch=8))
    ref3 = x3 + pe3[:8]
    assert out3.shape == x3.shape
    assert jnp.allclose(out3, ref3, atol=1e-4, rtol=1e-4)

    # 4) bf16 input: f32 accumulate in-kernel, bf16 store
    x4 = jax.random.normal(k4, (8, 4, 64), dtype=jnp.float32).astype(jnp.bfloat16)
    pe4 = make_positional_encoding(64, 64)
    out4 = jax.block_until_ready(positional_encoding_forward(x4))
    ref4 = (x4.astype(jnp.float32) + pe4[:8]).astype(jnp.bfloat16)
    assert out4.shape == x4.shape
    assert jnp.allclose(out4.astype(jnp.float32), ref4.astype(jnp.float32), atol=0.05)

    print("KERNEL_OK")
</pallas_src>

<mosaic_0001>
module attributes {stable_mosaic.version = 11 : i64} {
  func.func @_pe_add_kernel_3d(%arg0: i32, %arg1: i32, %arg2: memref<2x2x32xf32, #tpu.memory_space<vmem>>, %arg3: memref<2x2x32xf32, #tpu.memory_space<vmem>>) attributes {dimension_semantics = [#tpu.dimension_semantics<parallel>, #tpu.dimension_semantics<parallel>], iteration_bounds = array<i64: 4, 1>, scalar_prefetch = 0 : i64, scratch_operands = 0 : i64, tpu.core_type = #tpu.core_type<tc>, window_params = [{transform_indices = @transform_0, window_bounds = array<i64: 2, 2, 32>}, {transform_indices = @transform_1, window_bounds = array<i64: 2, 2, 32>}]} {
    %c2_i32 = arith.constant 2 : i32
    %0 = arith.muli %arg0, %c2_i32 : i32
    %1 = tpu.iota {dimensions = array<i32: 2>} : vector<1x1x32xi32>
    %c1_i32 = arith.constant 1 : i32
    %2 = vector.broadcast %c1_i32 : i32 to vector<1x1x32xi32>
    %3 = arith.andi %1, %2 : vector<1x1x32xi32>
    %4 = arith.subi %1, %3 : vector<1x1x32xi32>
    %5 = arith.sitofp %4 : vector<1x1x32xi32> to vector<1x1x32xf32>
    %cst = arith.constant -0.287823141 : f32
    %6 = vector.broadcast %cst : f32 to vector<1x1x32xf32>
    %7 = arith.mulf %5, %6 : vector<1x1x32xf32>
    %8 = math.exp %7 : vector<1x1x32xf32>
    %c1_i32_0 = arith.constant 1 : i32
    %9 = vector.broadcast %c1_i32_0 : i32 to vector<1x1x32xi32>
    %10 = arith.andi %1, %9 : vector<1x1x32xi32>
    %11 = arith.sitofp %10 : vector<1x1x32xi32> to vector<1x1x32xf32>
    %cst_1 = arith.constant 1.57079637 : f32
    %12 = vector.broadcast %cst_1 : f32 to vector<1x1x32xf32>
    %13 = arith.mulf %11, %12 : vector<1x1x32xf32>
    %14 = tpu.iota {dimensions = array<i32: 0>} : vector<2x1x32xi32>
    %15 = vector.broadcast %0 : i32 to vector<2x1x32xi32>
    %16 = arith.addi %14, %15 : vector<2x1x32xi32>
    %17 = arith.sitofp %16 : vector<2x1x32xi32> to vector<2x1x32xf32>
    %18 = vector.broadcast %8 : vector<1x1x32xf32> to vector<2x1x32xf32>
    %19 = arith.mulf %17, %18 : vector<2x1x32xf32>
    %20 = vector.broadcast %13 : vector<1x1x32xf32> to vector<2x1x32xf32>
    %21 = arith.addf %19, %20 : vector<2x1x32xf32>
    %22 = math.sin %21 : vector<2x1x32xf32>
    %c0 = arith.constant 0 : index
    %c0_2 = arith.constant 0 : index
    %c0_3 = arith.constant 0 : index
    %23 = vector.load %arg2[%c0, %c0_2, %c0_3] : memref<2x2x32xf32, #tpu.memory_space<vmem>>, vector<2x2x32xf32>
    %24 = vector.broadcast %22 : vector<2x1x32xf32> to vector<2x2x32xf32>
    %25 = arith.addf %23, %24 : vector<2x2x32xf32>
    %c0_4 = arith.constant 0 : index
    %c0_5 = arith.constant 0 : index
    %c0_6 = arith.constant 0 : index
    %26 = vector.load %arg3[%c0_4, %c0_5, %c0_6] : memref<2x2x32xf32, #tpu.memory_space<vmem>>, vector<2x2x32xf32>
    tpu.vector_store %arg3[%c0_4, %c0_5, %c0_6], %25 {strides = array<i32>} : memref<2x2x32xf32, #tpu.memory_space<vmem>>, vector<2x2x32xf32>,
    return
  }
  func.func @transform_0(%arg0: i32, %arg1: i32) -> (i32, i32, i32) {
    %c0_i32 = arith.constant 0 : i32
    %c0_i32_0 = arith.constant 0 : i32
    return %arg0, %arg1, %c0_i32 : i32, i32, i32
  }
  func.func @transform_1(%arg0: i32, %arg1: i32) -> (i32, i32, i32) {
    %c0_i32 = arith.constant 0 : i32
    %c0_i32_0 = arith.constant 0 : i32
    return %arg0, %arg1, %c0_i32 : i32, i32, i32
  }
}

</mosaic_0001>

<llo_original>
// kernel: tpu_custom_call.1
$region0: #{tpu_custom_call.1}
  #allocation0 [shape = 'u32[]', space=smem, size = 0x4, offset = 0x4, fixed_abs, tag = 'smem constant byte address 0x4 - core index']
  #allocation1 [shape = 'u32[144,128]{1,0:T(1,128)}', space=vmem, size = 0x12000, scoped, tag = 'internal scratch']
  %s0 = inlined_call_operand.hbm [shape: f32[8,2,32], index: 0, kind: input, shape index: {}]
  %s1 = inlined_call_operand.hbm [shape: f32[8,2,32], index: 1, kind: output, shape index: {}]
  %s2 = sld [smem:[#allocation0]]
  $region41: #{tpu_custom_call.1} parent=0
    _
  %s4 = ssub.s32 1, %s2
  %s5 = scalar_select 0, %s4, %s2
  $region1: #{tpu_custom_call.1} parent=0
    #allocation2 [shape = 'u8[4096]{0}', space=vmem, size = 0x1000, scoped, tag = 'input window, operand 0']
    #allocation3 [shape = 's32[2]{0}', space=sflag, size = 0x8, scoped, tag = 'scoped memory for tpu_custom_call.1']
    #allocation4 [shape = 's32[2]{0}', space=sflag, size = 0x8, scoped, tag = 'scoped memory for tpu_custom_call.1']
    #allocation5 [shape = 'u8[4096]{0}', space=vmem, size = 0x1000, scoped, tag = 'output window, operand 0']
    %6 = vsyncpa [#allocation3], 0
    %s7 = scalar_lea.sflag [#allocation3], 1
    %8 = vsyncpa %s7, 0
    %9 = vsyncpa [#allocation4], 0
    %s10 = scalar_lea.sflag [#allocation4], 1
    %11 = vsyncpa %s10, 0
    loop: start=0, step=1, limit=6
    $region2: #{tpu_custom_call.1} parent=1 // loop_pre_header
      _
    $region3: #{tpu_custom_call.1} parent=1 // loop_header
      %s13 = sphi 0, %s17
      %p14 = scmp.ge.s32.totalorder %s13, 6
      %s20 = sphi 0, %s32
      %s21 = sphi 0, %s28
      %s22 = sphi 0, %s20
      %s23 = sphi 0, %s21
      %s24 = sphi 0, %s22
      %s25 = sphi 0, %s23
      %s37 = sphi 0, %s39
      %s40 = sphi 0, %s37
      %s41 = sphi 0, %s40
      %s57 = sphi 0, %s41
      %s65 = sphi 0, %s67
      %s68 = sphi 0, %s65
      %s69 = sphi 0, %s68
      %s85 = sphi 0, %s69
    $region4: #{tpu_custom_call.1} parent=1 // loop_header_branch
      %16 = sbr.rel (%p14) target = $region8
    $region5: #{tpu_custom_call.1} parent=1 // loop_body
      %s18 = ssub.s32 %s13, 1
      %s19 = ssub.s32 %s13, 2
      %s26 = sadd.s32 1, %s21
      %p27 = scmp.ge.s32.totalorder %s26, 1
      %s28 = scalar_select %p27, 0, %s26
      %s29 = sadd.s32 1, %s20
      %s30 = scalar_select %p27, %s29, %s20
      %p31 = scmp.ge.s32.totalorder %s30, 4
      %s32 = scalar_select %p31, 0, %s30
      %s33 = ssub.s32 %s20, %s32
      %s34 = ssub.s32 %s21, %s28
      %s35 = sor.u32 %s33, %s34
      %p36 = scmp.eq.s32.totalorder %s35, 0
      %s38 = sadd.s32 %s37, 1
      %s39 = scalar_select %p36, %s37, %s38
      %p42 = pneg %p36
      %p43 = scmp.eq.s32.totalorder %s13, 3
      %p44 = por %p42, %p43
      %p45 = scmp.ne.s32.totalorder %s37, %s40
      %p46 = scmp.eq.s32.totalorder %s13, 0
      %p47 = por %p45, %p46
      %p48 = scmp.ne.s32.totalorder %s37, %s40
      %p49 = scmp.eq.s32.totalorder %s18, 3
      %p50 = por %p48, %p49
      %p51 = scmp.ne.s32.totalorder %s40, %s41
      %p52 = scmp.eq.s32.totalorder %s18, 0
      %p53 = por %p51, %p52
      %p54 = scmp.ne.s32.totalorder %s40, %s41
      %p55 = scmp.eq.s32.totalorder %s19, 3
      %p56 = por %p54, %p55
      %p58 = scmp.ne.s32.totalorder %s41, %s57
      %p59 = scmp.eq.s32.totalorder %s19, 0
      %p60 = por %p58, %p59
      %s61 = ssub.s32 %s20, %s32
      %s62 = ssub.s32 %s21, %s28
      %s63 = sor.u32 %s61, %s62
      %p64 = scmp.eq.s32.totalorder %s63, 0
      %s66 = sadd.s32 %s65, 1
      %s67 = scalar_select %p64, %s65, %s66
      %p70 = pneg %p64
      %p71 = scmp.eq.s32.totalorder %s13, 3
      %p72 = por %p70, %p71
      %p73 = scmp.ne.s32.totalorder %s65, %s68
      %p74 = scmp.eq.s32.totalorder %s13, 0
      %p75 = por %p73, %p74
      %p76 = scmp.ne.s32.totalorder %s65, %s68
      %p77 = scmp.eq.s32.totalorder %s18, 3
      %p78 = por %p76, %p77
      %p79 = scmp.ne.s32.totalorder %s68, %s69
      %p80 = scmp.eq.s32.totalorder %s18, 0
      %p81 = por %p79, %p80
      %p82 = scmp.ne.s32.totalorder %s68, %s69
      %p83 = scmp.eq.s32.totalorder %s19, 3
      %p84 = por %p82, %p83
      %p86 = scmp.ne.s32.totalorder %s69, %s85
      %p87 = scmp.eq.s32.totalorder %s19, 0
      %p88 = por %p86, %p87
      %p89 = scmp.le.s32.totalorder 1, %s13
      %p90 = scmp.lt.s32.totalorder %s13, 5
      %p91 = pnand %p89, %p90
      %p92 = pneg %p91
      // Predicated region
      $region9: #{tpu_custom_call.1} parent=5 // pred_check
        _
      $region10: #{tpu_custom_call.1} parent=5 // pred_check_branch
        %94 = sbr.rel (%p91) target = $region12
      $region11: #{tpu_custom_call.1} parent=5 // pred_region
        %s95 = ssub.s32 %s13, 1
      $region12: #{tpu_custom_call.1} parent=5 // pred_fallthru
        _
      %p96 = scmp.lt.s32.totalorder %s13, 4
      // Predicated region
      $region13: #{tpu_custom_call.1} parent=5 // pred_check
        %p97 = pneg %p96
      $region14: #{tpu_custom_call.1} parent=5 // pred_check_branch
        %99 = sbr.rel (%p97) target = $region16
      $region15: #{tpu_custom_call.1} parent=5 // pred_region
        // Predicated region
        $region17: #{tpu_custom_call.1} parent=15 // pred_check
          %p100 = pneg %p47
        $region18: #{tpu_custom_call.1} parent=15 // pred_check_branch
          %102 = sbr.rel (%p100) target = $region20
        $region19: #{tpu_custom_call.1} parent=15 // pred_region
          %s103 = sand.u32 %s37, 1
          %s104 = scalar_lea.sflag [#allocation3], %s103
          %s105 = sand.u32 %s37, 1
          %s106 = smul.addr %s105, 4
          %s107 = scalar_lea.vmem [#allocation2], %s106
          %s108 = smul.u32 2, %s20
          %s110 = ssub.s32 64, 64
          %111 = vsyncadd %s104, %s110
          %s112 = sadd.s32 %s21, %s108
          %s113 = smul.addr %s112, 32
          %s114 = scalar_lea.hbm %s0, %s113
          %s115 = sshll.u32 %s107, 4
          %s116 = int_to_ptr.vmem [resolvable:$true] %s115
          %121 = dma.hbm_to_vmem [thread:$0]  %s114, 64, %s116, %s104, 32, 32, 2
        $region20: #{tpu_custom_call.1} parent=15 // pred_fallthru
          _
      $region16: #{tpu_custom_call.1} parent=5 // pred_fallthru
        _
      %p122 = scmp.le.s32.totalorder 1, %s13
      %p123 = scmp.lt.s32.totalorder %s13, 5
      %p124 = pnand %p122, %p123
      %p125 = pneg %p124
      // Predicated region
      $region21: #{tpu_custom_call.1} parent=5 // pred_check
        _
      $region22: #{tpu_custom_call.1} parent=5 // pred_check_branch
        %127 = sbr.rel (%p124) target = $region24
      $region23: #{tpu_custom_call.1} parent=5 // pred_region
        %s128 = ssub.s32 %s13, 1
        %s129 = sand.u32 %s40, 1
        %s130 = scalar_lea.sflag [#allocation3], %s129
        %s131 = sand.u32 %s40, 1
        %s132 = smul.addr %s131, 4
        %s133 = scalar_lea.vmem [#allocation2], %s132
        // Predicated region
        $region25: #{tpu_custom_call.1} parent=23 // pred_check
          %p134 = pneg %p53
        $region26: #{tpu_custom_call.1} parent=23 // pred_check_branch
          %136 = sbr.rel (%p134) target = $region28
        $region27: #{tpu_custom_call.1} parent=23 // pred_region
          %137 = dma.done %s130, 64
        $region28: #{tpu_custom_call.1} parent=23 // pred_fallthru
          _
        %s138 = sand.u32 %s40, 1
        %s139 = scalar_lea.sflag [#allocation3], %s138
        %s140 = sand.u32 %s40, 1
        %s141 = smul.addr %s140, 4
        %s142 = scalar_lea.vmem [#allocation2], %s141
        %p143 = pneg %p53
        %p144 = pneg %p50
        %p145 = pneg %p81
        %p146 = pneg %p78
        %s147 = sand.u32 %s68, 1
        %s148 = scalar_lea.sflag [#allocation4], %s147
        %s149 = sand.u32 %s68, 1
        %s150 = smul.addr %s149, 4
        %s151 = scalar_lea.vmem [#allocation5], %s150
        %s152 = smul.u32 2, %s22
        %s153 = smul.u32 2, %s22
        %s154 = smul.u32 %s22, 2
        %v155 = vlaneseq
        %v156 = vand.u32 %v155, 127
        %v157 = vand.u32 %v156, 1
        %v158 = vsub.s32 %v156, %v157
        %v159 = vcvt.s32.f32 %v158
        %v160 = vmul.f32 %v159, -0.28782314
        %v161 = vmul.f32 %v160, 1.442695
        %v162 = vpow.pop %v161
        %v163 = vcvt.s32.f32 %v157
        %v164 = vmul.f32 %v163, 1.5707964
        %v165 = vstv %s154
        %v166 = vadd.s32 %v165, 1
        %v167 = vcvt.s32.f32 %v165
        %v168 = vcvt.s32.f32 %v166
        %v169 = vmul.f32 %v167, %v162
        %v170 = vmul.f32 %v168, %v162
        %v171 = vadd.f32 %v169, %v164
        %v172 = vadd.f32 %v170, %v164
        %v173 = vand.u32 2147483647, %v171
        %vm174 = vcmp.le.f32.partialorder %v173, 0.7853982
        %vm175 = vcmp.lt.s32.totalorder %v171, 0
        %v176 = vand.u32 %v171, 2139095040
        %v177 = vshrl.u32 %v176, 23
        %v178 = vsub.s32 %v177, 127
        %v179 = vand.u32 2147483647, %v171
        %v180 = vand.u32 %v179, 8388607
        %v181 = vor.u32 %v180, 8388608
        %v182 = vsub.s32 0, %v181
        %v183 = vadd.s32 %v178, 1
        %vm184 = vcmp.gt.s32.totalorder %v183, 0
        %v185 = vsel %vm184, %v183, 0
        %v186 = vshrl.u32 %v185, 5
        %v187 = vand.u32 %v185, 31
        %v188 = vsub.s32 32, %v187
        %v189 = vshrl.u32 683565275, %v188
        %v190 = vshll.u32 683565275, %v187
        %v191 = vshrl.u32 2475754826, %v188
        %v192 = vor.u32 %v190, %v191
        %v193 = vshll.u32 2475754826, %v187
        %v194 = vshrl.u32 2131351028, %v188
        %v195 = vor.u32 %v193, %v194
        %v196 = vshll.u32 2131351028, %v187
        %v197 = vshrl.u32 2102212464, %v188
        %v198 = vor.u32 %v196, %v197
        %v199 = vshll.u32 2102212464, %v187
        %v200 = vshrl.u32 920167782, %v188
        %v201 = vor.u32 %v199, %v200
        %v202 = vshll.u32 920167782, %v187
        %v203 = vshrl.u32 1326507024, %v188
        %v204 = vor.u32 %v202, %v203
        %vm205 = vcmp.lt.s32.totalorder %v186, 1
        %vm206 = vcmp.lt.s32.totalorder %v186, 2
        %vm207 = vcmp.lt.s32.totalorder %v186, 3
        %vm208 = vcmp.lt.s32.totalorder %v186, 4
        %v209 = vsel %vm205, %v189, %v192
        %v210 = vsel %vm208, %v198, 2102212464
        %v211 = vsel %vm207, %v195, %v210
        %v212 = vsel %vm206, %v209, %v211
        %v213 = vsel %vm205, %v192, %v195
        %v214 = vsel %vm208, %v201, 920167782
        %v215 = vsel %vm207, %v198, %v214
        %v216 = vsel %vm206, %v213, %v215
        %v217 = vsel %vm205, %v195, %v198
        %v218 = vsel %vm208, %v204, 1326507024
        %v219 = vsel %vm207, %v201, %v218
        %v220 = vsel %vm206, %v217, %v219
        %v221 = vshll.u32 %v181, 8
        %v222 = vmul.u32.u64.compose %v221, %v220
        %v223 = vextract.low.u32 %v222
        %v224 = vextract.high.u32 %v222
        %v225 = vmul.u32.u64.compose %v221, %v216
        %v226 = vextract.low.u32 %v225
        %v227 = vextract.high.u32 %v225
        %v228 = vmul.u32 %v221, %v212
        %v229 = vadd.s32 %v224, %v226
        %vm230 = vc.u32 %v224, %v226
        %v231 = vadd.s32 %v227, 1
        %v232 = vsel %vm230, %v231, %v227
        %v233 = vadd.s32 %v228, %v232
        %v234 = vadd.s32 %v233, 536870912
        %v235 = vshrl.u32 %v234, 30
        %v236 = vshll.u32 %v235, 30
        %v237 = vsub.s32 %v233, %v236
        %vm238 = vcmp.lt.s32.totalorder %v237, 0
        %v239 = vsub.s32 0, %v237
        %v240 = vsel %vm238, %v239, %v237
        %v241 = vclz %v240
        %v242 = vsub.s32 %v241, 2
        %vm243 = vcmp.gt.s32.totalorder 0, %v242
        %v244 = vsel %vm243, 0, %v242
        %v245 = vsub.s32 32, %v244
        %v246 = vshll.u32 %v237, %v244
        %v247 = vshrl.u32 %v229, %v245
        %v248 = vor.u32 %v246, %v247
        %v249 = vsub.s32 4294967266, %v244
        %v250 = vadd.s32 %v249, 127
        %v251 = vshll.u32 %v250, 23
        %v252 = vor.u32 4788187, %v251
        %v253 = vand.u32 2147483647, %v252
        %v255 = vcvt.s32.f32 %v248
        %v256 = vmul.f32 %v255, %v253
        %v257 = vxor.u32 %v256, 2147483648
        %v258 = vsel %vm175, %v257, %v256
        %v259 = vsub.s32 4, %v235
        %v260 = vsel %vm175, %v259, %v235
        %v261 = vsel %vm174, %v171, %v258
        %v262 = vsel %vm174, 0, %v260
        %v263 = vcosq.f32.pop %v261
        %v264 = vsinq.f32.pop %v261
        %vm265 = vweird.f32 %v171
        %v266 = vadd.s32 %v262, 3
        %v267 = vand.u32 %v266, 3
        %vm268 = vcmp.lt.s32.totalorder %v267, 2
        %vm269 = vcmp.eq.s32.totalorder %v267, 0
        %v270 = vxor.u32 %v264, 2147483648
        %v271 = vsel %vm269, %v263, %v270
        %vm272 = vcmp.eq.s32.totalorder %v267, 2
        %v273 = vxor.u32 %v263, 2147483648
        %v274 = vsel %vm272, %v273, %v264
        %v275 = vsel %vm268, %v271, %v274
        %v276 = vsel %vm265, nan, %v275
        %v277 = vand.u32 2147483647, %v172
        %vm278 = vcmp.le.f32.partialorder %v277, 0.7853982
        %vm279 = vcmp.lt.s32.totalorder %v172, 0
        %v280 = vand.u32 %v172, 2139095040
        %v281 = vshrl.u32 %v280, 23
        %v282 = vsub.s32 %v281, 127
        %v283 = vand.u32 2147483647, %v172
        %v284 = vand.u32 %v283, 8388607
        %v285 = vor.u32 %v284, 8388608
        %v286 = vsub.s32 0, %v285
        %v287 = vadd.s32 %v282, 1
        %vm288 = vcmp.gt.s32.totalorder %v287, 0
        %v289 = vsel %vm288, %v287, 0
        %v290 = vshrl.u32 %v289, 5
        %v291 = vand.u32 %v289, 31
        %v292 = vsub.s32 32, %v291
        %v293 = vshrl.u32 683565275, %v292
        %v294 = vshll.u32 683565275, %v291
        %v295 = vshrl.u32 2475754826, %v292
        %v296 = vor.u32 %v294, %v295
        %v297 = vshll.u32 2475754826, %v291
        %v298 = vshrl.u32 2131351028, %v292
        %v299 = vor.u32 %v297, %v298
        %v300 = vshll.u32 2131351028, %v291
        %v301 = vshrl.u32 2102212464, %v292
        %v302 = vor.u32 %v300, %v301
        %v303 = vshll.u32 2102212464, %v291
        %v304 = vshrl.u32 920167782, %v292
        %v305 = vor.u32 %v303, %v304
        %v306 = vshll.u32 920167782, %v291
        %v307 = vshrl.u32 1326507024, %v292
        %v308 = vor.u32 %v306, %v307
        %vm309 = vcmp.lt.s32.totalorder %v290, 1
        %vm310 = vcmp.lt.s32.totalorder %v290, 2
        %vm311 = vcmp.lt.s32.totalorder %v290, 3
        %vm312 = vcmp.lt.s32.totalorder %v290, 4
        %v313 = vsel %vm309, %v293, %v296
        %v314 = vsel %vm312, %v302, 2102212464
        %v315 = vsel %vm311, %v299, %v314
        %v316 = vsel %vm310, %v313, %v315
        %v317 = vsel %vm309, %v296, %v299
        %v318 = vsel %vm312, %v305, 920167782
        %v319 = vsel %vm311, %v302, %v318
        %v320 = vsel %vm310, %v317, %v319
        %v321 = vsel %vm309, %v299, %v302
        %v322 = vsel %vm312, %v308, 1326507024
        %v323 = vsel %vm311, %v305, %v322
        %v324 = vsel %vm310, %v321, %v323
        %v325 = vshll.u32 %v285, 8
        %v326 = vmul.u32.u64.compose %v325, %v324
        %v327 = vextract.low.u32 %v326
        %v328 = vextract.high.u32 %v326
        %v329 = vmul.u32.u64.compose %v325, %v320
        %v330 = vextract.low.u32 %v329
        %v331 = vextract.high.u32 %v329
        %v332 = vmul.u32 %v325, %v316
        %v333 = vadd.s32 %v328, %v330
        %vm334 = vc.u32 %v328, %v330
        %v335 = vadd.s32 %v331, 1
        %v336 = vsel %vm334, %v335, %v331
        %v337 = vadd.s32 %v332, %v336
        %v338 = vadd.s32 %v337, 536870912
        %v339 = vshrl.u32 %v338, 30
        %v340 = vshll.u32 %v339, 30
        %v341 = vsub.s32 %v337, %v340
        %vm342 = vcmp.lt.s32.totalorder %v341, 0
        %v343 = vsub.s32 0, %v341
        %v344 = vsel %vm342, %v343, %v341
        %v345 = vclz %v344
        %v346 = vsub.s32 %v345, 2
        %vm347 = vcmp.gt.s32.totalorder 0, %v346
        %v348 = vsel %vm347, 0, %v346
        %v349 = vsub.s32 32, %v348
        %v350 = vshll.u32 %v341, %v348
        %v351 = vshrl.u32 %v333, %v349
        %v352 = vor.u32 %v350, %v351
        %v353 = vsub.s32 4294967266, %v348
        %v354 = vadd.s32 %v353, 127
        %v355 = vshll.u32 %v354, 23
        %v356 = vor.u32 4788187, %v355
        %v357 = vand.u32 2147483647, %v356
        %v359 = vcvt.s32.f32 %v352
        %v360 = vmul.f32 %v359, %v357
        %v361 = vxor.u32 %v360, 2147483648
        %v362 = vsel %vm279, %v361, %v360
        %v363 = vsub.s32 4, %v339
        %v364 = vsel %vm279, %v363, %v339
        %v365 = vsel %vm278, %v172, %v362
        %v366 = vsel %vm278, 0, %v364
        %v367 = vcosq.f32.pop %v365
        %v368 = vsinq.f32.pop %v365
        %vm369 = vweird.f32 %v172
        %v370 = vadd.s32 %v366, 3
        %v371 = vand.u32 %v370, 3
        %vm372 = vcmp.lt.s32.totalorder %v371, 2
        %vm373 = vcmp.eq.s32.totalorder %v371, 0
        %v374 = vxor.u32 %v368, 2147483648
        %v375 = vsel %vm373, %v367, %v374
        %vm376 = vcmp.eq.s32.totalorder %v371, 2
        %v377 = vxor.u32 %v367, 2147483648
        %v378 = vsel %vm376, %v377, %v368
        %v379 = vsel %vm372, %v375, %v378
        %v380 = vsel %vm369, nan, %v379
        %v381 = vld [vmem:[%s133] sm:$0x3]
        %v382 = vld [vmem:[%s133 + $0x2] sm:$0x3]
        %v383 = vadd.f32 %v381, %v276
        %v384 = vadd.f32 %v382, %v380
        %vm385 = vcmask 254976
        %386 = vst.msk [vmem:[%s151] sm:$0x3] %vm385, %v383
        %387 = vst.msk [vmem:[%s151 + $0x2] sm:$0x3] %vm385, %v384
        %s388 = sand.u32 %s68, 1
        %s389 = scalar_lea.sflag [#allocation4], %s388
        %s390 = sand.u32 %s68, 1
        %s391 = smul.addr %s390, 4
        %s392 = scalar_lea.vmem [#allocation5], %s391
        // Predicated region
        $region29: #{tpu_custom_call.1} parent=23 // pred_check
          %p393 = pneg %p78
        $region30: #{tpu_custom_call.1} parent=23 // pred_check_branch
          %395 = sbr.rel (%p393) target = $region32
        $region31: #{tpu_custom_call.1} parent=23 // pred_region
          %s396 = smul.u32 2, %s22
          %s398 = ssub.s32 64, 64
          %399 = vsyncadd %s389, %s398
          %s400 = sadd.s32 %s23, %s396
          %s401 = smul.addr %s400, 32
          %s402 = scalar_lea.hbm %s1, %s401
          %s403 = sshll.u32 %s392, 4
          %s404 = int_to_ptr.vmem [resolvable:$true] %s403
          %409 = dma.vmem_to_hbm [thread:$0]  %s404, 64, %s402, %s389, 32, 32, 2
        $region32: #{tpu_custom_call.1} parent=23 // pred_fallthru
          _
      $region24: #{tpu_custom_call.1} parent=5 // pred_fallthru
        _
      %p410 = scmp.le.s32.totalorder 2, %s13
      // Predicated region
      $region33: #{tpu_custom_call.1} parent=5 // pred_check
        %p411 = pneg %p410
      $region34: #{tpu_custom_call.1} parent=5 // pred_check_branch
        %413 = sbr.rel (%p411) target = $region36
      $region35: #{tpu_custom_call.1} parent=5 // pred_region
        %s414 = ssub.s32 %s13, 2
        // Predicated region
        $region37: #{tpu_custom_call.1} parent=35 // pred_check
          %p415 = pneg %p84
        $region38: #{tpu_custom_call.1} parent=35 // pred_check_branch
          %417 = sbr.rel (%p415) target = $region40
        $region39: #{tpu_custom_call.1} parent=35 // pred_region
          %s418 = sand.u32 %s69, 1
          %s419 = scalar_lea.sflag [#allocation4], %s418
          %s420 = sand.u32 %s69, 1
          %s421 = smul.addr %s420, 4
          %s422 = scalar_lea.vmem [#allocation5], %s421
          %423 = dma.done %s419, 64
        $region40: #{tpu_custom_call.1} parent=35 // pred_fallthru
          _
      $region36: #{tpu_custom_call.1} parent=5 // pred_fallthru
        _
    $region6: #{tpu_custom_call.1} parent=1 // loop_footer
      %s17 = sadd.s32 1, %s13
    $region7: #{tpu_custom_call.1} parent=1 // loop_footer_branch
      %12 = sbr.rel target = $region3
    $region8: #{tpu_custom_call.1} parent=1 // loop_exit
      _
    %424 = vsyncpa [#allocation3], 1
    %s425 = scalar_lea.sflag [#allocation3], 1
    %426 = vsyncpa %s425, 1
    %427 = vsyncpa [#allocation4], 1
    %s428 = scalar_lea.sflag [#allocation4], 1
    %429 = vsyncpa %s428, 1

</llo_original>
